<compile_context>
chip_gen: v7x
topology: tpu7x:2x2x1
jax: 0.10.0
libtpu: 0.0.40
codegen_flags: <defaults>
</compile_context>

<pallas_src>
import math

import jax
import jax.numpy as jnp
from jax.experimental import pallas as pl
from jax.experimental.pallas import tpu as pltpu


# ----------------------------------------------------------------------------
# Fused DIFM kernel: one grid step handles a block of Bblk batch elements.
# ----------------------------------------------------------------------------
def _difm_kernel(ca_ref, cba_ref, cb_ref, cab_ref, w_ref, o_ref):
    # ca/cba/cb/cab: (Bblk, C, HW)   w: (4C, 2C+1)   o: (Bblk, 2C, HW)
    bblk, C, HW = ca_ref.shape
    inv_hw = 1.0 / HW
    f32 = jnp.float32
    out_dt = o_ref.dtype

    w = w_ref[...].astype(f32)              # (4C, 2C+1)
    w_mat = w[:, 0:2 * C]                   # block-diag(Wa_eff, Wb_eff): (4C, 2C)
    w_bias = w[:, 2 * C:2 * C + 1]          # [ba_eff ; bb_eff]:          (4C, 1)

    # Static unroll over the batch block.  The heavy traffic (loads, |diff|,
    # reduce, scaling, stores) is fully vectorized per element on (C, HW)
    # slabs; only the tiny (4C,2C)x(2C,1) mat-vec is per element, which is the
    # minimal attention FLOP count (no HW inflation of MXU work).
    for i in range(bblk):
        ca = ca_ref[i].astype(f32)          # (C, HW)
        cba = cba_ref[i].astype(f32)
        cb = cb_ref[i].astype(f32)
        cab = cab_ref[i].astype(f32)

        # Per-channel GAP of the two |diff| maps.  Lane reduce with keepdims
        # keeps channels on sublanes -> no relayout needed downstream.
        m_a = jnp.sum(jnp.abs(ca - cba), axis=-1, keepdims=True) * inv_hw  # (C, 1)
        m_b = jnp.sum(jnp.abs(cb - cab), axis=-1, keepdims=True) * inv_hw  # (C, 1)
        m = jnp.concatenate([m_a, m_b], axis=0)                            # (2C, 1)

        # Both DCAttention branches (conv1d + channel_expand pre-folded,
        # block-diag stacked) in one tiny mat-vec + folded bias.
        z = jnp.dot(w_mat, m, preferred_element_type=f32) + w_bias         # (4C, 1)
        scale = 1.0 + jax.nn.sigmoid(z)
        s_a = scale[0:2 * C]        # 1 + cam_a -> multiplies cat(c_b, c_ab)
        s_b = scale[2 * C:4 * C]    # 1 + cam_b -> multiplies cat(c_a, c_ba)

        # DI_fusion = cat(c_a,c_ba)*(1+cam_b) + cat(c_b,c_ab)*(1+cam_a)
        o_ref[i, 0:C, :] = (ca * s_b[0:C] + cb * s_a[0:C]).astype(out_dt)
        o_ref[i, C:, :] = (cba * s_b[C:] + cab * s_a[C:]).astype(out_dt)


# ----------------------------------------------------------------------------
# Parameter folding: Conv1d(1,1,3,pad=1) over channels + Conv1d(C,2C,1)
# collapse exactly into  z = W_eff @ gap + b_eff.
# ----------------------------------------------------------------------------
def _fold_dca(conv_w, conv_b, exp_w, exp_b):
    C = exp_w.shape[1]
    k = conv_w.reshape(3).astype(jnp.float32)
    row = jnp.arange(C)[:, None]
    col = jnp.arange(C)[None, :]
    band = (k[0] * (col == row - 1).astype(jnp.float32)
            + k[1] * (col == row).astype(jnp.float32)
            + k[2] * (col == row + 1).astype(jnp.float32))                 # (C, C)
    w_exp = exp_w.reshape(2 * C, C).astype(jnp.float32)
    hi = jax.lax.Precision.HIGHEST
    w_eff = jnp.dot(w_exp, band, precision=hi)                             # (2C, C)
    b_eff = jnp.sum(w_exp, axis=1) * conv_b[0] + exp_b                     # (2C,)
    return w_eff, b_eff


def _build_w_all(params):
    """Block-diag stack of both folded DCA branches, bias as last column."""
    wa, ba = _fold_dca(*params["dca_a"])
    wb, bb = _fold_dca(*params["dca_b"])
    C = wa.shape[1]
    w_all = jnp.zeros((4 * C, 2 * C + 1), jnp.float32)
    w_all = w_all.at[0:2 * C, 0:C].set(wa)
    w_all = w_all.at[2 * C:4 * C, C:2 * C].set(wb)
    w_all = w_all.at[0:2 * C, 2 * C].set(ba)
    w_all = w_all.at[2 * C:4 * C, 2 * C].set(bb)
    return w_all                                                            # (4C, 2C+1)


# ----------------------------------------------------------------------------
# DIFM forward (wrapper around the single fused pallas_call)
# ----------------------------------------------------------------------------
def difm_forward(params, c_a, c_ba, c_b, c_ab):
    """Inputs: four NCHW tensors (B, C, H, W).  Output: (B, 2C, H, W)."""
    B, C, H, W = c_a.shape
    HW = H * W
    dtype = c_a.dtype

    w_all = _build_w_all(params)

    # Channel-major, flattened-spatial layout (pure reshape of NCHW, no
    # transpose); last dim HW is lane-dense.  No dtype cast: bf16 passes
    # straight through (kernel upcasts to f32 internally).
    ca = c_a.reshape(B, C, HW)
    cba = c_ba.reshape(B, C, HW)
    cb = c_b.reshape(B, C, HW)
    cab = c_ab.reshape(B, C, HW)

    # Batch-block size: 4 input + 1 double-width output slabs per element,
    # double-buffered; stay well under every generation's scoped VMEM default.
    bytes_per = jnp.dtype(dtype).itemsize
    per_elem = 6 * C * HW * bytes_per * 2
    budget = 8 * 1024 * 1024
    bblk = int(max(1, min(B, 32, budget // max(per_elem, 1))))
    grid = (pl.cdiv(B, bblk),)

    act_spec = pl.BlockSpec((bblk, C, HW), lambda b: (b, 0, 0))
    w_spec = pl.BlockSpec((4 * C, 2 * C + 1), lambda b: (0, 0))

    out = pl.pallas_call(
        _difm_kernel,
        out_shape=jax.ShapeDtypeStruct((B, 2 * C, HW), dtype),
        grid=grid,
        in_specs=[act_spec, act_spec, act_spec, act_spec, w_spec],
        out_specs=pl.BlockSpec((bblk, 2 * C, HW), lambda b: (b, 0, 0)),
        compiler_params=pltpu.CompilerParams(
            dimension_semantics=("parallel",)),
    )(ca, cba, cb, cab, w_all)

    return out.reshape(B, 2 * C, H, W)


# ----------------------------------------------------------------------------
# Deterministic parameter init (PyTorch-default-like uniform fan-in scaling)
# ----------------------------------------------------------------------------
def _dca_params(key, in_channels):
    k1, k2, k3, k4 = jax.random.split(key, 4)
    c = in_channels
    bound1 = 1.0 / math.sqrt(1 * 3)                   # Conv1d(1, 1, 3)
    conv_w = jax.random.uniform(k1, (1, 1, 3), jnp.float32, -bound1, bound1)
    conv_b = jax.random.uniform(k2, (1,), jnp.float32, -bound1, bound1)
    bound2 = 1.0 / math.sqrt(c * 1)                   # Conv1d(C, 2C, 1)
    exp_w = jax.random.uniform(k3, (2 * c, c, 1), jnp.float32, -bound2, bound2)
    exp_b = jax.random.uniform(k4, (2 * c,), jnp.float32, -bound2, bound2)
    return conv_w, conv_b, exp_w, exp_b


def init_difm_params(key, input_dim):
    ka, kb = jax.random.split(key)
    # _SAM_a/_SAM_b (SpatialAttentionModule) are unused in DIFM.forward().
    return {"dca_a": _dca_params(ka, input_dim),
            "dca_b": _dca_params(kb, input_dim)}


# ----------------------------------------------------------------------------
# Pure-JAX reference (mirrors the PyTorch ops) for a sanity check
# ----------------------------------------------------------------------------
def _dca_reference(x, conv_w, conv_b, exp_w, exp_b):
    B, C, H, W = x.shape
    g = jnp.mean(x, axis=(2, 3))                                  # (B, C)
    gp = jnp.pad(g, ((0, 0), (1, 1)))
    k = conv_w.reshape(3)
    y = (k[0] * gp[:, 0:C] + k[1] * gp[:, 1:C + 1]
         + k[2] * gp[:, 2:C + 2] + conv_b[0])                     # (B, C)
    z = jnp.dot(y, exp_w.reshape(2 * C, C).T,
                precision=jax.lax.Precision.HIGHEST) + exp_b      # (B, 2C)
    return jax.nn.sigmoid(z)


def _difm_reference(params, c_a, c_ba, c_b, c_ab):
    cam_a = _dca_reference(jnp.abs(c_a - c_ba), *params["dca_a"])[:, :, None, None]
    cam_b = _dca_reference(jnp.abs(c_b - c_ab), *params["dca_b"])[:, :, None, None]
    fa = jnp.concatenate([c_a, c_ba], axis=1)
    fa = fa * cam_b + fa
    fb = jnp.concatenate([c_b, c_ab], axis=1)
    fb = fb * cam_a + fb
    return fa + fb


if __name__ == "__main__":
    key = jax.random.PRNGKey(0)
    kp, k1, k2, k3, k4 = jax.random.split(key, 5)

    B, C, H, W = 2, 16, 16, 16            # DIFM(input_dim=16)
    params = init_difm_params(kp, C)

    c_a = jax.random.normal(k1, (B, C, H, W), jnp.float32)
    c_ba = jax.random.normal(k2, (B, C, H, W), jnp.float32)
    c_b = jax.random.normal(k3, (B, C, H, W), jnp.float32)
    c_ab = jax.random.normal(k4, (B, C, H, W), jnp.float32)

    fwd = jax.jit(lambda a, ab_, b, bb_: difm_forward(params, a, ab_, b, bb_))
    out = fwd(c_a, c_ba, c_b, c_ab)
    jax.block_until_ready(out)

    assert out.shape == (B, 2 * C, H, W), out.shape
    assert out.dtype == jnp.float32

    ref = _difm_reference(params, c_a, c_ba, c_b, c_ab)
    assert jnp.allclose(out, ref, rtol=2e-3, atol=2e-3), (
        float(jnp.max(jnp.abs(out - ref))))
    print("KERNEL_OK")
</pallas_src>

<mosaic_0001>
module attributes {stable_mosaic.version = 11 : i64} {
  func.func @_difm_kernel(%arg0: i32, %arg1: memref<2x16x256xf32, #tpu.memory_space<vmem>>, %arg2: memref<2x16x256xf32, #tpu.memory_space<vmem>>, %arg3: memref<2x16x256xf32, #tpu.memory_space<vmem>>, %arg4: memref<2x16x256xf32, #tpu.memory_space<vmem>>, %arg5: memref<64x33xf32, #tpu.memory_space<vmem>>, %arg6: memref<2x32x256xf32, #tpu.memory_space<vmem>>) attributes {dimension_semantics = [#tpu.dimension_semantics<parallel>], iteration_bounds = array<i64: 1>, scalar_prefetch = 0 : i64, scratch_operands = 0 : i64, tpu.core_type = #tpu.core_type<tc>, window_params = [{transform_indices = @transform_0, window_bounds = array<i64: 2, 16, 256>}, {transform_indices = @transform_1, window_bounds = array<i64: 2, 16, 256>}, {transform_indices = @transform_2, window_bounds = array<i64: 2, 16, 256>}, {transform_indices = @transform_3, window_bounds = array<i64: 2, 16, 256>}, {pipeline_mode = #tpu.pipeline_mode<synchronous>, transform_indices = @transform_4, window_bounds = array<i64: 64, 33>}, {transform_indices = @transform_5, window_bounds = array<i64: 2, 32, 256>}]} {
    %c0 = arith.constant 0 : index
    %c0_0 = arith.constant 0 : index
    %0 = vector.load %arg5[%c0, %c0_0] : memref<64x33xf32, #tpu.memory_space<vmem>>, vector<64x33xf32>
    %1 = vector.extract_strided_slice %0 {offsets = [0, 0], sizes = [64, 32], strides = [1, 1]} : vector<64x33xf32> to vector<64x32xf32>
    %2 = vector.extract_strided_slice %0 {offsets = [0, 32], sizes = [64, 1], strides = [1, 1]} : vector<64x33xf32> to vector<64x1xf32>
    %c0_1 = arith.constant 0 : index
    %c0_2 = arith.constant 0 : index
    %c0_3 = arith.constant 0 : index
    %3 = vector.load %arg1[%c0_1, %c0_2, %c0_3] : memref<2x16x256xf32, #tpu.memory_space<vmem>>, vector<1x16x256xf32>
    %4 = vector.shape_cast %3 : vector<1x16x256xf32> to vector<16x256xf32>
    %c0_4 = arith.constant 0 : index
    %c0_5 = arith.constant 0 : index
    %c0_6 = arith.constant 0 : index
    %5 = vector.load %arg2[%c0_4, %c0_5, %c0_6] : memref<2x16x256xf32, #tpu.memory_space<vmem>>, vector<1x16x256xf32>
    %6 = vector.shape_cast %5 : vector<1x16x256xf32> to vector<16x256xf32>
    %c0_7 = arith.constant 0 : index
    %c0_8 = arith.constant 0 : index
    %c0_9 = arith.constant 0 : index
    %7 = vector.load %arg3[%c0_7, %c0_8, %c0_9] : memref<2x16x256xf32, #tpu.memory_space<vmem>>, vector<1x16x256xf32>
    %8 = vector.shape_cast %7 : vector<1x16x256xf32> to vector<16x256xf32>
    %c0_10 = arith.constant 0 : index
    %c0_11 = arith.constant 0 : index
    %c0_12 = arith.constant 0 : index
    %9 = vector.load %arg4[%c0_10, %c0_11, %c0_12] : memref<2x16x256xf32, #tpu.memory_space<vmem>>, vector<1x16x256xf32>
    %10 = vector.shape_cast %9 : vector<1x16x256xf32> to vector<16x256xf32>
    %11 = arith.subf %4, %6 : vector<16x256xf32>
    %12 = math.absf %11 : vector<16x256xf32>
    %cst = arith.constant dense<0.000000e+00> : vector<16xf32>
    %13 = vector.multi_reduction <add>, %12, %cst [1] : vector<16x256xf32> to vector<16xf32>
    %14 = vector.shape_cast %13 : vector<16xf32> to vector<16x1xf32>
    %cst_13 = arith.constant 3.906250e-03 : f32
    %15 = vector.broadcast %cst_13 : f32 to vector<16x1xf32>
    %16 = arith.mulf %14, %15 : vector<16x1xf32>
    %17 = arith.subf %8, %10 : vector<16x256xf32>
    %18 = math.absf %17 : vector<16x256xf32>
    %cst_14 = arith.constant dense<0.000000e+00> : vector<16xf32>
    %19 = vector.multi_reduction <add>, %18, %cst_14 [1] : vector<16x256xf32> to vector<16xf32>
    %20 = vector.shape_cast %19 : vector<16xf32> to vector<16x1xf32>
    %cst_15 = arith.constant 3.906250e-03 : f32
    %21 = vector.broadcast %cst_15 : f32 to vector<16x1xf32>
    %22 = arith.mulf %20, %21 : vector<16x1xf32>
    %23 = tpu.concatenate %16, %22 in 0 : vector<16x1xf32>, vector<16x1xf32> -> vector<32x1xf32>
    %cst_16 = arith.constant dense<0.000000e+00> : vector<64x1xf32>
    %24 = tpu.matmul %1, %23, %cst_16 {dimension_numbers = #tpu.dot_dimension_numbers<[1], [0], [0], [1], [0, 0, 1, 1], [], []>} : vector<64x32xf32>, vector<32x1xf32>, vector<64x1xf32> -> vector<64x1xf32>
    %25 = arith.addf %24, %2 : vector<64x1xf32>
    %26 = arith.negf %25 : vector<64x1xf32>
    %27 = math.exp %26 : vector<64x1xf32>
    %cst_17 = arith.constant 1.000000e+00 : f32
    %28 = vector.broadcast %cst_17 : f32 to vector<64x1xf32>
    %29 = arith.addf %28, %27 : vector<64x1xf32>
    %30 = arith.divf %28, %29 : vector<64x1xf32>
    %cst_18 = arith.constant 1.000000e+00 : f32
    %31 = vector.broadcast %cst_18 : f32 to vector<64x1xf32>
    %32 = arith.addf %31, %30 : vector<64x1xf32>
    %33 = vector.extract_strided_slice %32 {offsets = [0, 0], sizes = [32, 1], strides = [1, 1]} : vector<64x1xf32> to vector<32x1xf32>
    %34 = vector.extract_strided_slice %32 {offsets = [32, 0], sizes = [32, 1], strides = [1, 1]} : vector<64x1xf32> to vector<32x1xf32>
    %35 = vector.extract_strided_slice %34 {offsets = [0, 0], sizes = [16, 1], strides = [1, 1]} : vector<32x1xf32> to vector<16x1xf32>
    %36 = vector.broadcast %35 : vector<16x1xf32> to vector<16x256xf32>
    %37 = arith.mulf %4, %36 : vector<16x256xf32>
    %38 = vector.extract_strided_slice %33 {offsets = [0, 0], sizes = [16, 1], strides = [1, 1]} : vector<32x1xf32> to vector<16x1xf32>
    %39 = vector.broadcast %38 : vector<16x1xf32> to vector<16x256xf32>
    %40 = arith.mulf %8, %39 : vector<16x256xf32>
    %41 = arith.addf %37, %40 : vector<16x256xf32>
    %c0_19 = arith.constant 0 : index
    %c0_20 = arith.constant 0 : index
    %c0_21 = arith.constant 0 : index
    %42 = vector.load %arg6[%c0_19, %c0_20, %c0_21] : memref<2x32x256xf32, #tpu.memory_space<vmem>>, vector<1x16x256xf32>
    %43 = vector.shape_cast %42 : vector<1x16x256xf32> to vector<16x256xf32>
    %44 = vector.shape_cast %41 : vector<16x256xf32> to vector<1x16x256xf32>
    tpu.vector_store %arg6[%c0_19, %c0_20, %c0_21], %44 {strides = array<i32>} : memref<2x32x256xf32, #tpu.memory_space<vmem>>, vector<1x16x256xf32>,
    %45 = vector.extract_strided_slice %34 {offsets = [16, 0], sizes = [16, 1], strides = [1, 1]} : vector<32x1xf32> to vector<16x1xf32>
    %46 = vector.broadcast %45 : vector<16x1xf32> to vector<16x256xf32>
    %47 = arith.mulf %6, %46 : vector<16x256xf32>
    %48 = vector.extract_strided_slice %33 {offsets = [16, 0], sizes = [16, 1], strides = [1, 1]} : vector<32x1xf32> to vector<16x1xf32>
    %49 = vector.broadcast %48 : vector<16x1xf32> to vector<16x256xf32>
    %50 = arith.mulf %10, %49 : vector<16x256xf32>
    %51 = arith.addf %47, %50 : vector<16x256xf32>
    %c0_22 = arith.constant 0 : index
    %c16 = arith.constant 16 : index
    %c0_23 = arith.constant 0 : index
    %52 = vector.load %arg6[%c0_22, %c16, %c0_23] : memref<2x32x256xf32, #tpu.memory_space<vmem>>, vector<1x16x256xf32>
    %53 = vector.shape_cast %52 : vector<1x16x256xf32> to vector<16x256xf32>
    %54 = vector.shape_cast %51 : vector<16x256xf32> to vector<1x16x256xf32>
    tpu.vector_store %arg6[%c0_22, %c16, %c0_23], %54 {strides = array<i32>} : memref<2x32x256xf32, #tpu.memory_space<vmem>>, vector<1x16x256xf32>,
    %c1 = arith.constant 1 : index
    %c0_24 = arith.constant 0 : index
    %c0_25 = arith.constant 0 : index
    %55 = vector.load %arg1[%c1, %c0_24, %c0_25] : memref<2x16x256xf32, #tpu.memory_space<vmem>>, vector<1x16x256xf32>
    %56 = vector.shape_cast %55 : vector<1x16x256xf32> to vector<16x256xf32>
    %c1_26 = arith.constant 1 : index
    %c0_27 = arith.constant 0 : index
    %c0_28 = arith.constant 0 : index
    %57 = vector.load %arg2[%c1_26, %c0_27, %c0_28] : memref<2x16x256xf32, #tpu.memory_space<vmem>>, vector<1x16x256xf32>
    %58 = vector.shape_cast %57 : vector<1x16x256xf32> to vector<16x256xf32>
    %c1_29 = arith.constant 1 : index
    %c0_30 = arith.constant 0 : index
    %c0_31 = arith.constant 0 : index
    %59 = vector.load %arg3[%c1_29, %c0_30, %c0_31] : memref<2x16x256xf32, #tpu.memory_space<vmem>>, vector<1x16x256xf32>
    %60 = vector.shape_cast %59 : vector<1x16x256xf32> to vector<16x256xf32>
    %c1_32 = arith.constant 1 : index
    %c0_33 = arith.constant 0 : index
    %c0_34 = arith.constant 0 : index
    %61 = vector.load %arg4[%c1_32, %c0_33, %c0_34] : memref<2x16x256xf32, #tpu.memory_space<vmem>>, vector<1x16x256xf32>
    %62 = vector.shape_cast %61 : vector<1x16x256xf32> to vector<16x256xf32>
    %63 = arith.subf %56, %58 : vector<16x256xf32>
    %64 = math.absf %63 : vector<16x256xf32>
    %cst_35 = arith.constant dense<0.000000e+00> : vector<16xf32>
    %65 = vector.multi_reduction <add>, %64, %cst_35 [1] : vector<16x256xf32> to vector<16xf32>
    %66 = vector.shape_cast %65 : vector<16xf32> to vector<16x1xf32>
    %cst_36 = arith.constant 3.906250e-03 : f32
    %67 = vector.broadcast %cst_36 : f32 to vector<16x1xf32>
    %68 = arith.mulf %66, %67 : vector<16x1xf32>
    %69 = arith.subf %60, %62 : vector<16x256xf32>
    %70 = math.absf %69 : vector<16x256xf32>
    %cst_37 = arith.constant dense<0.000000e+00> : vector<16xf32>
    %71 = vector.multi_reduction <add>, %70, %cst_37 [1] : vector<16x256xf32> to vector<16xf32>
    %72 = vector.shape_cast %71 : vector<16xf32> to vector<16x1xf32>
    %cst_38 = arith.constant 3.906250e-03 : f32
    %73 = vector.broadcast %cst_38 : f32 to vector<16x1xf32>
    %74 = arith.mulf %72, %73 : vector<16x1xf32>
    %75 = tpu.concatenate %68, %74 in 0 : vector<16x1xf32>, vector<16x1xf32> -> vector<32x1xf32>
    %cst_39 = arith.constant dense<0.000000e+00> : vector<64x1xf32>
    %76 = tpu.matmul %1, %75, %cst_39 {dimension_numbers = #tpu.dot_dimension_numbers<[1], [0], [0], [1], [0, 0, 1, 1], [], []>} : vector<64x32xf32>, vector<32x1xf32>, vector<64x1xf32> -> vector<64x1xf32>
    %77 = arith.addf %76, %2 : vector<64x1xf32>
    %78 = arith.negf %77 : vector<64x1xf32>
    %79 = math.exp %78 : vector<64x1xf32>
    %cst_40 = arith.constant 1.000000e+00 : f32
    %80 = vector.broadcast %cst_40 : f32 to vector<64x1xf32>
    %81 = arith.addf %80, %79 : vector<64x1xf32>
    %82 = arith.divf %80, %81 : vector<64x1xf32>
    %cst_41 = arith.constant 1.000000e+00 : f32
    %83 = vector.broadcast %cst_41 : f32 to vector<64x1xf32>
    %84 = arith.addf %83, %82 : vector<64x1xf32>
    %85 = vector.extract_strided_slice %84 {offsets = [0, 0], sizes = [32, 1], strides = [1, 1]} : vector<64x1xf32> to vector<32x1xf32>
    %86 = vector.extract_strided_slice %84 {offsets = [32, 0], sizes = [32, 1], strides = [1, 1]} : vector<64x1xf32> to vector<32x1xf32>
    %87 = vector.extract_strided_slice %86 {offsets = [0, 0], sizes = [16, 1], strides = [1, 1]} : vector<32x1xf32> to vector<16x1xf32>
    %88 = vector.broadcast %87 : vector<16x1xf32> to vector<16x256xf32>
    %89 = arith.mulf %56, %88 : vector<16x256xf32>
    %90 = vector.extract_strided_slice %85 {offsets = [0, 0], sizes = [16, 1], strides = [1, 1]} : vector<32x1xf32> to vector<16x1xf32>
    %91 = vector.broadcast %90 : vector<16x1xf32> to vector<16x256xf32>
    %92 = arith.mulf %60, %91 : vector<16x256xf32>
    %93 = arith.addf %89, %92 : vector<16x256xf32>
    %c1_42 = arith.constant 1 : index
    %c0_43 = arith.constant 0 : index
    %c0_44 = arith.constant 0 : index
    %94 = vector.load %arg6[%c1_42, %c0_43, %c0_44] : memref<2x32x256xf32, #tpu.memory_space<vmem>>, vector<1x16x256xf32>
    %95 = vector.shape_cast %94 : vector<1x16x256xf32> to vector<16x256xf32>
    %96 = vector.shape_cast %93 : vector<16x256xf32> to vector<1x16x256xf32>
    tpu.vector_store %arg6[%c1_42, %c0_43, %c0_44], %96 {strides = array<i32>} : memref<2x32x256xf32, #tpu.memory_space<vmem>>, vector<1x16x256xf32>,
    %97 = vector.extract_strided_slice %86 {offsets = [16, 0], sizes = [16, 1], strides = [1, 1]} : vector<32x1xf32> to vector<16x1xf32>
    %98 = vector.broadcast %97 : vector<16x1xf32> to vector<16x256xf32>
    %99 = arith.mulf %58, %98 : vector<16x256xf32>
    %100 = vector.extract_strided_slice %85 {offsets = [16, 0], sizes = [16, 1], strides = [1, 1]} : vector<32x1xf32> to vector<16x1xf32>
    %101 = vector.broadcast %100 : vector<16x1xf32> to vector<16x256xf32>
    %102 = arith.mulf %62, %101 : vector<16x256xf32>
    %103 = arith.addf %99, %102 : vector<16x256xf32>
    %c1_45 = arith.constant 1 : index
    %c16_46 = arith.constant 16 : index
    %c0_47 = arith.constant 0 : index
    %104 = vector.load %arg6[%c1_45, %c16_46, %c0_47] : memref<2x32x256xf32, #tpu.memory_space<vmem>>, vector<1x16x256xf32>
    %105 = vector.shape_cast %104 : vector<1x16x256xf32> to vector<16x256xf32>
    %106 = vector.shape_cast %103 : vector<16x256xf32> to vector<1x16x256xf32>
    tpu.vector_store %arg6[%c1_45, %c16_46, %c0_47], %106 {strides = array<i32>} : memref<2x32x256xf32, #tpu.memory_space<vmem>>, vector<1x16x256xf32>,
    return
  }
  func.func @transform_0(%arg0: i32) -> (i32, i32, i32) {
    %c0_i32 = arith.constant 0 : i32
    %c0_i32_0 = arith.constant 0 : i32
    %c0_i32_1 = arith.constant 0 : i32
    return %arg0, %c0_i32, %c0_i32_0 : i32, i32, i32
  }
  func.func @transform_1(%arg0: i32) -> (i32, i32, i32) {
    %c0_i32 = arith.constant 0 : i32
    %c0_i32_0 = arith.constant 0 : i32
    %c0_i32_1 = arith.constant 0 : i32
    return %arg0, %c0_i32, %c0_i32_0 : i32, i32, i32
  }
  func.func @transform_2(%arg0: i32) -> (i32, i32, i32) {
    %c0_i32 = arith.constant 0 : i32
    %c0_i32_0 = arith.constant 0 : i32
    %c0_i32_1 = arith.constant 0 : i32
    return %arg0, %c0_i32, %c0_i32_0 : i32, i32, i32
  }
  func.func @transform_3(%arg0: i32) -> (i32, i32, i32) {
    %c0_i32 = arith.constant 0 : i32
    %c0_i32_0 = arith.constant 0 : i32
    %c0_i32_1 = arith.constant 0 : i32
    return %arg0, %c0_i32, %c0_i32_0 : i32, i32, i32
  }
  func.func @transform_4(%arg0: i32) -> (i32, i32) {
    %c0_i32 = arith.constant 0 : i32
    %c0_i32_0 = arith.constant 0 : i32
    %c0_i32_1 = arith.constant 0 : i32
    return %c0_i32, %c0_i32_0 : i32, i32
  }
  func.func @transform_5(%arg0: i32) -> (i32, i32, i32) {
    %c0_i32 = arith.constant 0 : i32
    %c0_i32_0 = arith.constant 0 : i32
    %c0_i32_1 = arith.constant 0 : i32
    return %arg0, %c0_i32, %c0_i32_0 : i32, i32, i32
  }
}

</mosaic_0001>

<llo_original>
// kernel: _lambda_.1
$region0: #{_lambda_.1}
  #allocation0 [shape = 'u32[]', space=smem, size = 0x4, offset = 0x4, fixed_abs, tag = 'smem constant byte address 0x4 - core index']
  #allocation1 [shape = 'u32[144,128]{1,0:T(1,128)}', space=vmem, size = 0x12000, scoped, tag = 'internal scratch']
  %s0 = inlined_call_operand.vmem [shape: f32[2,16,256], index: 0, kind: input, shape index: {}]
  %s1 = inlined_call_operand.vmem [shape: f32[2,16,256], index: 1, kind: input, shape index: {}]
  %s2 = inlined_call_operand.vmem [shape: f32[2,16,256], index: 2, kind: input, shape index: {}]
  %s3 = inlined_call_operand.vmem [shape: f32[2,16,256], index: 3, kind: input, shape index: {}]
  %s4 = inlined_call_operand.vmem [shape: f32[64,33], index: 4, kind: input, shape index: {}]
  %s5 = inlined_call_operand.vmem [shape: f32[2,32,256], index: 5, kind: output, shape index: {}]
  %s6 = sld [smem:[#allocation0]]
  $region30: #{_lambda_.1} parent=0
    _
  %s8 = ssub.s32 1, %s6
  %s9 = scalar_select 0, %s8, %s6
  // Predicated region
  $region2: #{_lambda_.1} parent=0 // pred_check
    _
  $region3: #{_lambda_.1} parent=0 // pred_check_branch
    %11 = sbr.rel (0) target = $region5
  $region4: #{_lambda_.1} parent=0 // pred_region
    _
  $region5: #{_lambda_.1} parent=0 // pred_fallthru
    _
  // Predicated region
  $region6: #{_lambda_.1} parent=0 // pred_check
    _
  $region7: #{_lambda_.1} parent=0 // pred_check_branch
    %13 = sbr.rel (0) target = $region9
  $region8: #{_lambda_.1} parent=0 // pred_region
    _
  $region9: #{_lambda_.1} parent=0 // pred_fallthru
    _
  // Predicated region
  $region10: #{_lambda_.1} parent=0 // pred_check
    _
  $region11: #{_lambda_.1} parent=0 // pred_check_branch
    %15 = sbr.rel (0) target = $region13
  $region12: #{_lambda_.1} parent=0 // pred_region
    _
  $region13: #{_lambda_.1} parent=0 // pred_fallthru
    _
  // Predicated region
  $region14: #{_lambda_.1} parent=0 // pred_check
    _
  $region15: #{_lambda_.1} parent=0 // pred_check_branch
    %17 = sbr.rel (0) target = $region17
  $region16: #{_lambda_.1} parent=0 // pred_region
    _
  $region17: #{_lambda_.1} parent=0 // pred_fallthru
    _
  // Predicated region
  $region18: #{_lambda_.1} parent=0 // pred_check
    _
  $region19: #{_lambda_.1} parent=0 // pred_check_branch
    %19 = sbr.rel (0) target = $region21
  $region20: #{_lambda_.1} parent=0 // pred_region
    _
  $region21: #{_lambda_.1} parent=0 // pred_fallthru
    _
  %v20 = vld [vmem:[%s4] sm:$0xff]
  %v21 = vld [vmem:[%s4 + $0x8] sm:$0xff]
  %v22 = vld [vmem:[%s4 + $0x10] sm:$0xff]
  %v23 = vld [vmem:[%s4 + $0x18] sm:$0xff]
  %v24 = vld [vmem:[%s4 + $0x20] sm:$0xff]
  %v25 = vld [vmem:[%s4 + $0x28] sm:$0xff]
  %v26 = vld [vmem:[%s4 + $0x30] sm:$0xff]
  %v27 = vld [vmem:[%s4 + $0x38] sm:$0xff]
  %v28 = vld [vmem:[%s0] sm:$0xff]
  %v29 = vld [vmem:[%s0 + $0x8] sm:$0xff]
  %v30 = vld [vmem:[%s0 + $0x10] sm:$0xff]
  %v31 = vld [vmem:[%s0 + $0x18] sm:$0xff]
  %v32 = vld [vmem:[%s1] sm:$0xff]
  %v33 = vld [vmem:[%s1 + $0x8] sm:$0xff]
  %v34 = vld [vmem:[%s1 + $0x10] sm:$0xff]
  %v35 = vld [vmem:[%s1 + $0x18] sm:$0xff]
  %v36 = vld [vmem:[%s2] sm:$0xff]
  %v37 = vld [vmem:[%s2 + $0x8] sm:$0xff]
  %v38 = vld [vmem:[%s2 + $0x10] sm:$0xff]
  %v39 = vld [vmem:[%s2 + $0x18] sm:$0xff]
  %v40 = vld [vmem:[%s3] sm:$0xff]
  %v41 = vld [vmem:[%s3 + $0x8] sm:$0xff]
  %v42 = vld [vmem:[%s3 + $0x10] sm:$0xff]
  %v43 = vld [vmem:[%s3 + $0x18] sm:$0xff]
  %v44 = vsub.f32 %v28, %v32
  %v45 = vsub.f32 %v29, %v33
  %v46 = vsub.f32 %v30, %v34
  %v47 = vsub.f32 %v31, %v35
  %v48 = vand.u32 2147483647, %v44
  %v49 = vand.u32 2147483647, %v45
  %v50 = vand.u32 2147483647, %v46
  %v51 = vand.u32 2147483647, %v47
  %v52 = vadd.f32 %v48, %v49
  %53 = vadd.xlane.f32.xlu0 %v52
  %v54 = vpop.xlane.xlu0 %53
  %v55 = vadd.f32 %v50, %v51
  %56 = vadd.xlane.f32.xlu0 %v55
  %v57 = vpop.xlane.xlu0 %56
  %v58 = vmul.f32 %v54, 0.00390625
  %v59 = vmul.f32 %v57, 0.00390625
  %v60 = vsub.f32 %v36, %v40
  %v61 = vsub.f32 %v37, %v41
  %v62 = vsub.f32 %v38, %v42
  %v63 = vsub.f32 %v39, %v43
  %v64 = vand.u32 2147483647, %v60
  %v65 = vand.u32 2147483647, %v61
  %v66 = vand.u32 2147483647, %v62
  %v67 = vand.u32 2147483647, %v63
  %v68 = vadd.f32 %v64, %v65
  %69 = vadd.xlane.f32.xlu0 %v68
  %v70 = vpop.xlane.xlu0 %69
  %v71 = vadd.f32 %v66, %v67
  %72 = vadd.xlane.f32.xlu0 %v71
  %v73 = vpop.xlane.xlu0 %72
  %v74 = vmul.f32 %v70, 0.00390625
  %v75 = vmul.f32 %v73, 0.00390625
  %84 = vrot.lane.b32.xlu0 %v20, 96
  %v85 = vpop.permute.xlu0 %84
  %86 = vrot.lane.b32.xlu0 %v21, 96
  %v87 = vpop.permute.xlu0 %86
  %88 = vrot.lane.b32.xlu0 %v22, 96
  %v89 = vpop.permute.xlu0 %88
  %90 = vrot.lane.b32.xlu0 %v23, 96
  %v91 = vpop.permute.xlu0 %90
  %92 = vrot.lane.b32.xlu0 %v24, 96
  %v93 = vpop.permute.xlu0 %92
  %94 = vrot.lane.b32.xlu0 %v25, 96
  %v95 = vpop.permute.xlu0 %94
  %96 = vrot.lane.b32.xlu0 %v26, 96
  %v97 = vpop.permute.xlu0 %96
  %98 = vrot.lane.b32.xlu0 %v27, 96
  %v99 = vpop.permute.xlu0 %98
  %vm108 = vcmask 261120
  %v109 = vsel %vm108, %v20, 0
  %v111 = vsel %vm108, %v21, 0
  %v113 = vsel %vm108, %v22, 0
  %v115 = vsel %vm108, %v23, 0
  %v117 = vsel %vm108, %v24, 0
  %v119 = vsel %vm108, %v25, 0
  %v121 = vsel %vm108, %v26, 0
  %v123 = vsel %vm108, %v27, 0
  %125 = vmatprep.subr.mxu0 0.0
  %126 = vmatpush1.msra.mxu0 %v58
  %127 = vmatprep.subr.mxu0 0.0
  %128 = vmatpush1.msra.mxu0 %v59
  %129 = vmatprep.subr.mxu0 0.0
  %130 = vmatpush1.msra.mxu0 %v74
  %131 = vmatprep.subr.mxu0 0.0
  %132 = vmatpush1.msra.mxu0 %v75
  %133 = vmatprep.subr.mxu0 0.0
  %134 = vmatpush1.msra.mxu0 0.0
  %135 = vmatprep.subr.mxu0 0.0
  %136 = vmatpush1.msra.mxu0 0.0
  %137 = vmatprep.subr.mxu0 0.0
  %138 = vmatpush1.msra.mxu0 0.0
  %139 = vmatprep.subr.mxu0 0.0
  %140 = vmatpush1.msra.mxu0 0.0
  %141 = vmatprep.subr.mxu0 0.0
  %142 = vmatpush1.msra.mxu0 0.0
  %143 = vmatprep.subr.mxu0 0.0
  %144 = vmatpush1.msra.mxu0 0.0
  %145 = vmatprep.subr.mxu0 0.0
  %146 = vmatpush1.msra.mxu0 0.0
  %147 = vmatprep.subr.mxu0 0.0
  %148 = vmatpush1.msra.mxu0 0.0
  %149 = vmatprep.subr.mxu0 0.0
  %150 = vmatpush1.msra.mxu0 0.0
  %151 = vmatprep.subr.mxu0 0.0
  %152 = vmatpush1.msra.mxu0 0.0
  %153 = vmatprep.subr.mxu0 0.0
  %154 = vmatpush1.msra.mxu0 0.0
  %155 = vmatprep.subr.mxu0 0.0
  %156 = vmatpush1.msra.mxu0 0.0
  %157 = vmatprep.subr.mxu0 0.0
  %158 = vmatpush1.msra.mxu0 0.0
  %159 = vmatprep.subr.mxu0 0.0
  %160 = vmatpush1.msra.mxu0 0.0
  %161 = vmatprep.subr.mxu0 0.0
  %162 = vmatpush1.msra.mxu0 0.0
  %163 = vmatprep.subr.mxu0 0.0
  %164 = vmatpush1.msra.mxu0 0.0
  %165 = vmatprep.subr.mxu0 0.0
  %166 = vmatpush1.msra.mxu0 0.0
  %167 = vmatprep.subr.mxu0 0.0
  %168 = vmatpush1.msra.mxu0 0.0
  %169 = vmatprep.subr.mxu0 0.0
  %170 = vmatpush1.msra.mxu0 0.0
  %171 = vmatprep.subr.mxu0 0.0
  %172 = vmatpush1.msra.mxu0 0.0
  %173 = vmatprep.subr.mxu0 0.0
  %174 = vmatpush1.msra.mxu0 0.0
  %175 = vmatprep.subr.mxu0 0.0
  %176 = vmatpush1.msra.mxu0 0.0
  %177 = vmatprep.subr.mxu0 0.0
  %178 = vmatpush1.msra.mxu0 0.0
  %179 = vmatprep.subr.mxu0 0.0
  %180 = vmatpush1.msra.mxu0 0.0
  %181 = vmatprep.subr.mxu0 0.0
  %182 = vmatpush1.msra.mxu0 0.0
  %183 = vmatprep.subr.mxu0 0.0
  %184 = vmatpush1.msra.mxu0 0.0
  %185 = vmatprep.subr.mxu0 0.0
  %186 = vmatpush1.msra.mxu0 0.0
  %187 = vmatprep.subr.mxu0 0.0
  %188 = vmatpush1.msra.mxu0 0.0
  %189 = vmatprep.mubr.f32.mxu0 0.0
  %190 = vmatmul.mubr.f32.gmra.mrb[0].mxu0 %v109
  %v191 = vpop.f32.mrb[0].mxu0
  %v192 = vadd.f32 %v85, %v191
  %v193 = vpop.f32.mrb[0].mxu0
  %194 = vmatprep.mubr.f32.mxu0 0.0
  %195 = vmatmul.mubr.f32.gmra.mrb[0].mxu0 %v111
  %v196 = vpop.f32.mrb[0].mxu0
  %v197 = vadd.f32 %v87, %v196
  %v198 = vpop.f32.mrb[0].mxu0
  %199 = vmatprep.mubr.f32.mxu0 0.0
  %200 = vmatmul.mubr.f32.gmra.mrb[0].mxu0 %v113
  %v201 = vpop.f32.mrb[0].mxu0
  %v202 = vadd.f32 %v89, %v201
  %v203 = vpop.f32.mrb[0].mxu0
  %204 = vmatprep.mubr.f32.mxu0 0.0
  %205 = vmatmul.mubr.f32.gmra.mrb[0].mxu0 %v115
  %v206 = vpop.f32.mrb[0].mxu0
  %v207 = vadd.f32 %v91, %v206
  %v208 = vpop.f32.mrb[0].mxu0
  %209 = vmatprep.mubr.f32.mxu0 0.0
  %210 = vmatmul.mubr.f32.gmra.mrb[0].mxu0 %v117
  %v211 = vpop.f32.mrb[0].mxu0
  %v212 = vadd.f32 %v93, %v211
  %v213 = vpop.f32.mrb[0].mxu0
  %214 = vmatprep.mubr.f32.mxu0 0.0
  %215 = vmatmul.mubr.f32.gmra.mrb[0].mxu0 %v119
  %v216 = vpop.f32.mrb[0].mxu0
  %v217 = vadd.f32 %v95, %v216
  %v218 = vpop.f32.mrb[0].mxu0
  %219 = vmatprep.mubr.f32.mxu0 0.0
  %220 = vmatmul.mubr.f32.gmra.mrb[0].mxu0 %v121
  %v221 = vpop.f32.mrb[0].mxu0
  %v222 = vadd.f32 %v97, %v221
  %v223 = vpop.f32.mrb[0].mxu0
  %224 = vmatprep.mubr.f32.mxu0 0.0
  %225 = vmatmul.mubr.f32.gmra.mrb[0].mxu0 %v123
  %v226 = vpop.f32.mrb[0].mxu0
  %v227 = vadd.f32 %v99, %v226
  %v228 = vpop.f32.mrb[0].mxu0
  %229 = vdwg.mxu0
  %v230 = vxor.u32 %v192, 2147483648
  %v231 = vxor.u32 %v197, 2147483648
  %v232 = vxor.u32 %v202, 2147483648
  %v233 = vxor.u32 %v207, 2147483648
  %v234 = vxor.u32 %v212, 2147483648
  %v235 = vxor.u32 %v217, 2147483648
  %v236 = vxor.u32 %v222, 2147483648
  %v237 = vxor.u32 %v227, 2147483648
  %v238 = vmul.f32 %v230, 1.442695
  %v239 = vpow.pop %v238
  %v240 = vmul.f32 %v231, 1.442695
  %v241 = vpow.pop %v240
  %v242 = vmul.f32 %v232, 1.442695
  %v243 = vpow.pop %v242
  %v244 = vmul.f32 %v233, 1.442695
  %v245 = vpow.pop %v244
  %v246 = vmul.f32 %v234, 1.442695
  %v247 = vpow.pop %v246
  %v248 = vmul.f32 %v235, 1.442695
  %v249 = vpow.pop %v248
  %v250 = vmul.f32 %v236, 1.442695
  %v251 = vpow.pop %v250
  %v252 = vmul.f32 %v237, 1.442695
  %v253 = vpow.pop %v252
  %v254 = vadd.f32 %v239, 1.0
  %v255 = vadd.f32 %v241, 1.0
  %v256 = vadd.f32 %v243, 1.0
  %v257 = vadd.f32 %v245, 1.0
  %v258 = vadd.f32 %v247, 1.0
  %v259 = vadd.f32 %v249, 1.0
  %v260 = vadd.f32 %v251, 1.0
  %v261 = vadd.f32 %v253, 1.0
  %v262 = vrcp.pop %v254
  %v263 = vmul.f32 1.0, %v262
  %v264 = vrcp.pop %v255
  %v265 = vmul.f32 1.0, %v264
  %v266 = vrcp.pop %v256
  %v267 = vmul.f32 1.0, %v266
  %v268 = vrcp.pop %v257
  %v269 = vmul.f32 1.0, %v268
  %v270 = vrcp.pop %v258
  %v271 = vmul.f32 1.0, %v270
  %v272 = vrcp.pop %v259
  %v273 = vmul.f32 1.0, %v272
  %v274 = vrcp.pop %v260
  %v275 = vmul.f32 1.0, %v274
  %v276 = vrcp.pop %v261
  %v277 = vmul.f32 1.0, %v276
  %v278 = vadd.f32 %v263, 1.0
  %v279 = vadd.f32 %v265, 1.0
  %v280 = vadd.f32 %v267, 1.0
  %v281 = vadd.f32 %v269, 1.0
  %v282 = vadd.f32 %v271, 1.0
  %v283 = vadd.f32 %v273, 1.0
  %v284 = vadd.f32 %v275, 1.0
  %v285 = vadd.f32 %v277, 1.0
  %287 = vset.pattern.permute.xlu0 0
  %288 = vperm.xlu0 %287, %v282
  %v289 = vpop.permute.xlu0 %288
  %292 = vset.pattern.permute.xlu0 0
  %293 = vperm.xlu0 %292, %v283
  %v294 = vpop.permute.xlu0 %293
  %v296 = vmul.f32 %v28, %v289
  %v297 = vmul.f32 %v29, %v289
  %v298 = vmul.f32 %v30, %v294
  %v299 = vmul.f32 %v31, %v294
  %301 = vset.pattern.permute.xlu0 0
  %302 = vperm.xlu0 %301, %v278
  %v303 = vpop.permute.xlu0 %302
  %306 = vset.pattern.permute.xlu0 0
  %307 = vperm.xlu0 %306, %v279
  %v308 = vpop.permute.xlu0 %307
  %v310 = vmul.f32 %v36, %v303
  %v311 = vmul.f32 %v37, %v303
  %v312 = vmul.f32 %v38, %v308
  %v313 = vmul.f32 %v39, %v308
  %v314 = vadd.f32 %v296, %v310
  %v315 = vadd.f32 %v297, %v311
  %v316 = vadd.f32 %v298, %v312
  %v317 = vadd.f32 %v299, %v313
  %318 = vst [vmem:[%s5] sm:$0xff] %v314
  %319 = vst [vmem:[%s5 + $0x8] sm:$0xff] %v315
  %320 = vst [vmem:[%s5 + $0x10] sm:$0xff] %v316
  %321 = vst [vmem:[%s5 + $0x18] sm:$0xff] %v317
  %323 = vset.pattern.permute.xlu0 0
  %324 = vperm.xlu0 %323, %v284
  %v325 = vpop.permute.xlu0 %324
  %328 = vset.pattern.permute.xlu0 0
  %329 = vperm.xlu0 %328, %v285
  %v330 = vpop.permute.xlu0 %329
  %v332 = vmul.f32 %v32, %v325
  %v333 = vmul.f32 %v33, %v325
  %v334 = vmul.f32 %v34, %v330
  %v335 = vmul.f32 %v35, %v330
  %337 = vset.pattern.permute.xlu0 0
  %338 = vperm.xlu0 %337, %v280
  %v339 = vpop.permute.xlu0 %338
  %342 = vset.pattern.permute.xlu0 0
  %343 = vperm.xlu0 %342, %v281
  %v344 = vpop.permute.xlu0 %343
  %v346 = vmul.f32 %v40, %v339
  %v347 = vmul.f32 %v41, %v339
  %v348 = vmul.f32 %v42, %v344
  %v349 = vmul.f32 %v43, %v344
  %v350 = vadd.f32 %v332, %v346
  %v351 = vadd.f32 %v333, %v347
  %v352 = vadd.f32 %v334, %v348
  %v353 = vadd.f32 %v335, %v349
  %354 = vst [vmem:[%s5 + $0x20] sm:$0xff] %v350
  %355 = vst [vmem:[%s5 + $0x28] sm:$0xff] %v351
  %356 = vst [vmem:[%s5 + $0x30] sm:$0xff] %v352
  %357 = vst [vmem:[%s5 + $0x38] sm:$0xff] %v353
  %s358 = scalar_lea.vmem %s0, 32
  %v359 = vld [vmem:[%s358] sm:$0xff]
  %v360 = vld [vmem:[%s358 + $0x8] sm:$0xff]
  %v361 = vld [vmem:[%s358 + $0x10] sm:$0xff]
  %v362 = vld [vmem:[%s358 + $0x18] sm:$0xff]
  %s363 = scalar_lea.vmem %s1, 32
  %v364 = vld [vmem:[%s363] sm:$0xff]
  %v365 = vld [vmem:[%s363 + $0x8] sm:$0xff]
  %v366 = vld [vmem:[%s363 + $0x10] sm:$0xff]
  %v367 = vld [vmem:[%s363 + $0x18] sm:$0xff]
  %s368 = scalar_lea.vmem %s2, 32
  %v369 = vld [vmem:[%s368] sm:$0xff]
  %v370 = vld [vmem:[%s368 + $0x8] sm:$0xff]
  %v371 = vld [vmem:[%s368 + $0x10] sm:$0xff]
  %v372 = vld [vmem:[%s368 + $0x18] sm:$0xff]
  %s373 = scalar_lea.vmem %s3, 32
  %v374 = vld [vmem:[%s373] sm:$0xff]
  %v375 = vld [vmem:[%s373 + $0x8] sm:$0xff]
  %v376 = vld [vmem:[%s373 + $0x10] sm:$0xff]
  %v377 = vld [vmem:[%s373 + $0x18] sm:$0xff]
  %v378 = vsub.f32 %v359, %v364
  %v379 = vsub.f32 %v360, %v365
  %v380 = vsub.f32 %v361, %v366
  %v381 = vsub.f32 %v362, %v367
  %v382 = vand.u32 2147483647, %v378
  %v383 = vand.u32 2147483647, %v379
  %v384 = vand.u32 2147483647, %v380
  %v385 = vand.u32 2147483647, %v381
  %v386 = vadd.f32 %v382, %v383
  %387 = vadd.xlane.f32.xlu0 %v386
  %v388 = vpop.xlane.xlu0 %387
  %v389 = vadd.f32 %v384, %v385
  %390 = vadd.xlane.f32.xlu0 %v389
  %v391 = vpop.xlane.xlu0 %390
  %v392 = vmul.f32 %v388, 0.00390625
  %v393 = vmul.f32 %v391, 0.00390625
  %v394 = vsub.f32 %v369, %v374
  %v395 = vsub.f32 %v370, %v375
  %v396 = vsub.f32 %v371, %v376
  %v397 = vsub.f32 %v372, %v377
  %v398 = vand.u32 2147483647, %v394
  %v399 = vand.u32 2147483647, %v395
  %v400 = vand.u32 2147483647, %v396
  %v401 = vand.u32 2147483647, %v397
  %v402 = vadd.f32 %v398, %v399
  %403 = vadd.xlane.f32.xlu0 %v402
  %v404 = vpop.xlane.xlu0 %403
  %v405 = vadd.f32 %v400, %v401
  %406 = vadd.xlane.f32.xlu0 %v405
  %v407 = vpop.xlane.xlu0 %406
  %v408 = vmul.f32 %v404, 0.00390625
  %v409 = vmul.f32 %v407, 0.00390625
  %410 = vmatprep.subr.mxu0 0.0
  %411 = vmatpush1.msra.mxu0 %v392
  %412 = vmatprep.subr.mxu0 0.0
  %413 = vmatpush1.msra.mxu0 %v393
  %414 = vmatprep.subr.mxu0 0.0
  %415 = vmatpush1.msra.mxu0 %v408
  %416 = vmatprep.subr.mxu0 0.0
  %417 = vmatpush1.msra.mxu0 %v409
  %418 = vmatprep.subr.mxu0 0.0
  %419 = vmatpush1.msra.mxu0 0.0
  %420 = vmatprep.subr.mxu0 0.0
  %421 = vmatpush1.msra.mxu0 0.0
  %422 = vmatprep.subr.mxu0 0.0
  %423 = vmatpush1.msra.mxu0 0.0
  %424 = vmatprep.subr.mxu0 0.0
  %425 = vmatpush1.msra.mxu0 0.0
  %426 = vmatprep.subr.mxu0 0.0
  %427 = vmatpush1.msra.mxu0 0.0
  %428 = vmatprep.subr.mxu0 0.0
  %429 = vmatpush1.msra.mxu0 0.0
  %430 = vmatprep.subr.mxu0 0.0
  %431 = vmatpush1.msra.mxu0 0.0
  %432 = vmatprep.subr.mxu0 0.0
  %433 = vmatpush1.msra.mxu0 0.0
  %434 = vmatprep.subr.mxu0 0.0
  %435 = vmatpush1.msra.mxu0 0.0
  %436 = vmatprep.subr.mxu0 0.0
  %437 = vmatpush1.msra.mxu0 0.0
  %438 = vmatprep.subr.mxu0 0.0
  %439 = vmatpush1.msra.mxu0 0.0
  %440 = vmatprep.subr.mxu0 0.0
  %441 = vmatpush1.msra.mxu0 0.0
  %442 = vmatprep.subr.mxu0 0.0
  %443 = vmatpush1.msra.mxu0 0.0
  %444 = vmatprep.subr.mxu0 0.0
  %445 = vmatpush1.msra.mxu0 0.0
  %446 = vmatprep.subr.mxu0 0.0
  %447 = vmatpush1.msra.mxu0 0.0
  %448 = vmatprep.subr.mxu0 0.0
  %449 = vmatpush1.msra.mxu0 0.0
  %450 = vmatprep.subr.mxu0 0.0
  %451 = vmatpush1.msra.mxu0 0.0
  %452 = vmatprep.subr.mxu0 0.0
  %453 = vmatpush1.msra.mxu0 0.0
  %454 = vmatprep.subr.mxu0 0.0
  %455 = vmatpush1.msra.mxu0 0.0
  %456 = vmatprep.subr.mxu0 0.0
  %457 = vmatpush1.msra.mxu0 0.0
  %458 = vmatprep.subr.mxu0 0.0
  %459 = vmatpush1.msra.mxu0 0.0
  %460 = vmatprep.subr.mxu0 0.0
  %461 = vmatpush1.msra.mxu0 0.0
  %462 = vmatprep.subr.mxu0 0.0
  %463 = vmatpush1.msra.mxu0 0.0
  %464 = vmatprep.subr.mxu0 0.0
  %465 = vmatpush1.msra.mxu0 0.0
  %466 = vmatprep.subr.mxu0 0.0
  %467 = vmatpush1.msra.mxu0 0.0
  %468 = vmatprep.subr.mxu0 0.0
  %469 = vmatpush1.msra.mxu0 0.0
  %470 = vmatprep.subr.mxu0 0.0
  %471 = vmatpush1.msra.mxu0 0.0
  %472 = vmatprep.subr.mxu0 0.0
  %473 = vmatpush1.msra.mxu0 0.0
  %474 = vmatprep.mubr.f32.mxu0 0.0
  %475 = vmatmul.mubr.f32.gmra.mrb[0].mxu0 %v109
  %v476 = vpop.f32.mrb[0].mxu0
  %v477 = vadd.f32 %v85, %v476
  %v478 = vpop.f32.mrb[0].mxu0
  %479 = vmatprep.mubr.f32.mxu0 0.0
  %480 = vmatmul.mubr.f32.gmra.mrb[0].mxu0 %v111
  %v481 = vpop.f32.mrb[0].mxu0
  %v482 = vadd.f32 %v87, %v481
  %v483 = vpop.f32.mrb[0].mxu0
  %484 = vmatprep.mubr.f32.mxu0 0.0
  %485 = vmatmul.mubr.f32.gmra.mrb[0].mxu0 %v113
  %v486 = vpop.f32.mrb[0].mxu0
  %v487 = vadd.f32 %v89, %v486
  %v488 = vpop.f32.mrb[0].mxu0
  %489 = vmatprep.mubr.f32.mxu0 0.0
  %490 = vmatmul.mubr.f32.gmra.mrb[0].mxu0 %v115
  %v491 = vpop.f32.mrb[0].mxu0
  %v492 = vadd.f32 %v91, %v491
  %v493 = vpop.f32.mrb[0].mxu0
  %494 = vmatprep.mubr.f32.mxu0 0.0
  %495 = vmatmul.mubr.f32.gmra.mrb[0].mxu0 %v117
  %v496 = vpop.f32.mrb[0].mxu0
  %v497 = vadd.f32 %v93, %v496
  %v498 = vpop.f32.mrb[0].mxu0
  %499 = vmatprep.mubr.f32.mxu0 0.0
  %500 = vmatmul.mubr.f32.gmra.mrb[0].mxu0 %v119
  %v501 = vpop.f32.mrb[0].mxu0
  %v502 = vadd.f32 %v95, %v501
  %v503 = vpop.f32.mrb[0].mxu0
  %504 = vmatprep.mubr.f32.mxu0 0.0
  %505 = vmatmul.mubr.f32.gmra.mrb[0].mxu0 %v121
  %v506 = vpop.f32.mrb[0].mxu0
  %v507 = vadd.f32 %v97, %v506
  %v508 = vpop.f32.mrb[0].mxu0
  %509 = vmatprep.mubr.f32.mxu0 0.0
  %510 = vmatmul.mubr.f32.gmra.mrb[0].mxu0 %v123
  %v511 = vpop.f32.mrb[0].mxu0
  %v512 = vadd.f32 %v99, %v511
  %v513 = vpop.f32.mrb[0].mxu0
  %514 = vdwg.mxu0
  %v515 = vxor.u32 %v477, 2147483648
  %v516 = vxor.u32 %v482, 2147483648
  %v517 = vxor.u32 %v487, 2147483648
  %v518 = vxor.u32 %v492, 2147483648
  %v519 = vxor.u32 %v497, 2147483648
  %v520 = vxor.u32 %v502, 2147483648
  %v521 = vxor.u32 %v507, 2147483648
  %v522 = vxor.u32 %v512, 2147483648
  %v523 = vmul.f32 %v515, 1.442695
  %v524 = vpow.pop %v523
  %v525 = vmul.f32 %v516, 1.442695
  %v526 = vpow.pop %v525
  %v527 = vmul.f32 %v517, 1.442695
  %v528 = vpow.pop %v527
  %v529 = vmul.f32 %v518, 1.442695
  %v530 = vpow.pop %v529
  %v531 = vmul.f32 %v519, 1.442695
  %v532 = vpow.pop %v531
  %v533 = vmul.f32 %v520, 1.442695
  %v534 = vpow.pop %v533
  %v535 = vmul.f32 %v521, 1.442695
  %v536 = vpow.pop %v535
  %v537 = vmul.f32 %v522, 1.442695
  %v538 = vpow.pop %v537
  %v539 = vadd.f32 %v524, 1.0
  %v540 = vadd.f32 %v526, 1.0
  %v541 = vadd.f32 %v528, 1.0
  %v542 = vadd.f32 %v530, 1.0
  %v543 = vadd.f32 %v532, 1.0
  %v544 = vadd.f32 %v534, 1.0
  %v545 = vadd.f32 %v536, 1.0
  %v546 = vadd.f32 %v538, 1.0
  %v547 = vrcp.pop %v539
  %v548 = vmul.f32 1.0, %v547
  %v549 = vrcp.pop %v540
  %v550 = vmul.f32 1.0, %v549
  %v551 = vrcp.pop %v541
  %v552 = vmul.f32 1.0, %v551
  %v553 = vrcp.pop %v542
  %v554 = vmul.f32 1.0, %v553
  %v555 = vrcp.pop %v543
  %v556 = vmul.f32 1.0, %v555
  %v557 = vrcp.pop %v544
  %v558 = vmul.f32 1.0, %v557
  %v559 = vrcp.pop %v545
  %v560 = vmul.f32 1.0, %v559
  %v561 = vrcp.pop %v546
  %v562 = vmul.f32 1.0, %v561
  %v563 = vadd.f32 %v548, 1.0
  %v564 = vadd.f32 %v550, 1.0
  %v565 = vadd.f32 %v552, 1.0
  %v566 = vadd.f32 %v554, 1.0
  %v567 = vadd.f32 %v556, 1.0
  %v568 = vadd.f32 %v558, 1.0
  %v569 = vadd.f32 %v560, 1.0
  %v570 = vadd.f32 %v562, 1.0
  %572 = vset.pattern.permute.xlu0 0
  %573 = vperm.xlu0 %572, %v567
  %v574 = vpop.permute.xlu0 %573
  %577 = vset.pattern.permute.xlu0 0
  %578 = vperm.xlu0 %577, %v568
  %v579 = vpop.permute.xlu0 %578
  %v581 = vmul.f32 %v359, %v574
  %v582 = vmul.f32 %v360, %v574
  %v583 = vmul.f32 %v361, %v579
  %v584 = vmul.f32 %v362, %v579
  %586 = vset.pattern.permute.xlu0 0
  %587 = vperm.xlu0 %586, %v563
  %v588 = vpop.permute.xlu0 %587
  %591 = vset.pattern.permute.xlu0 0
  %592 = vperm.xlu0 %591, %v564
  %v593 = vpop.permute.xlu0 %592
  %v595 = vmul.f32 %v369, %v588
  %v596 = vmul.f32 %v370, %v588
  %v597 = vmul.f32 %v371, %v593
  %v598 = vmul.f32 %v372, %v593
  %v599 = vadd.f32 %v581, %v595
  %v600 = vadd.f32 %v582, %v596
  %v601 = vadd.f32 %v583, %v597
  %v602 = vadd.f32 %v584, %v598
  %s603 = scalar_lea.vmem %s5, 64
  %604 = vst [vmem:[%s603] sm:$0xff] %v599
  %605 = vst [vmem:[%s603 + $0x8] sm:$0xff] %v600
  %606 = vst [vmem:[%s603 + $0x10] sm:$0xff] %v601
  %607 = vst [vmem:[%s603 + $0x18] sm:$0xff] %v602
  %609 = vset.pattern.permute.xlu0 0
  %610 = vperm.xlu0 %609, %v569
  %v611 = vpop.permute.xlu0 %610
  %614 = vset.pattern.permute.xlu0 0
  %615 = vperm.xlu0 %614, %v570
  %v616 = vpop.permute.xlu0 %615
  %v618 = vmul.f32 %v364, %v611
  %v619 = vmul.f32 %v365, %v611
  %v620 = vmul.f32 %v366, %v616
  %v621 = vmul.f32 %v367, %v616
  %623 = vset.pattern.permute.xlu0 0
  %624 = vperm.xlu0 %623, %v565
  %v625 = vpop.permute.xlu0 %624
  %628 = vset.pattern.permute.xlu0 0
  %629 = vperm.xlu0 %628, %v566
  %v630 = vpop.permute.xlu0 %629
  %v632 = vmul.f32 %v374, %v625
  %v633 = vmul.f32 %v375, %v625
  %v634 = vmul.f32 %v376, %v630
  %v635 = vmul.f32 %v377, %v630
  %v636 = vadd.f32 %v618, %v632
  %v637 = vadd.f32 %v619, %v633
  %v638 = vadd.f32 %v620, %v634
  %v639 = vadd.f32 %v621, %v635
  %640 = vst [vmem:[%s603 + $0x20] sm:$0xff] %v636
  %641 = vst [vmem:[%s603 + $0x28] sm:$0xff] %v637
  %642 = vst [vmem:[%s603 + $0x30] sm:$0xff] %v638
  %643 = vst [vmem:[%s603 + $0x38] sm:$0xff] %v639
  // Predicated region
  $region22: #{_lambda_.1} parent=0 // pred_check
    _
  $region23: #{_lambda_.1} parent=0 // pred_check_branch
    %645 = sbr.rel (0) target = $region25
  $region24: #{_lambda_.1} parent=0 // pred_region
    _
  $region25: #{_lambda_.1} parent=0 // pred_fallthru
    _
  // Predicated region
  $region26: #{_lambda_.1} parent=0 // pred_check
    _
  $region27: #{_lambda_.1} parent=0 // pred_check_branch
    %647 = sbr.rel (0) target = $region29
  $region28: #{_lambda_.1} parent=0 // pred_region
    _
  $region29: #{_lambda_.1} parent=0 // pred_fallthru
    _

</llo_original>
